<compile_context>
chip_gen: v7x
topology: tpu7x:2x2x1
jax: 0.10.0
libtpu: 0.0.40
codegen_flags: <defaults>
</compile_context>

<pallas_src>
import functools

import jax
import jax.numpy as jnp
from jax.experimental import pallas as pl
from jax.experimental.pallas import tpu as pltpu


def _round_up(x, m):
    return (x + m - 1) // m * m


def _pick_tile_n(V, requested):
    """Lane-multiple vocab tile; prefer one that divides the lane-rounded V."""
    v128 = _round_up(V, 128)
    requested = _round_up(requested, 128)
    if requested >= v128:
        return v128, v128                     # single full-width tile, no extra pad
    # Look for a multiple-of-128 divisor of v128 near the request, so the full
    # weight does not have to be re-padded (read+written) on every call.
    best = None
    lo, hi = max(128, requested // 2), requested * 2
    for cand in range(lo, hi + 1, 128):
        if v128 % cand == 0:
            if best is None or abs(cand - requested) < abs(best - requested):
                best = cand
    if best is not None:
        return best, v128
    return requested, _round_up(V, requested)


def _vmem_cap_bytes():
    try:
        phys = int(pltpu.get_tpu_info().vmem_capacity_bytes)
    except Exception:
        phys = 64 << 20                       # conservative: assume v7x-sized VMEM
    # Leave headroom for Mosaic internal scratch/semaphores.
    return max(min(int(phys * 0.8), phys - (16 << 20)), 32 << 20)


def _bf16_epilogue_supported():
    # bf16 VPU/EUP exists on v6e / v7x; v5e (and older) must keep f32.
    try:
        kind = jax.devices()[0].device_kind.lower()
    except Exception:
        return False
    return any(tag in kind for tag in ("v6", "v7", "7x"))


def mlm_kernel(x_ref, w_ref, b_ref, o_ref, *, tile_m, x_resident, log1p_dtype):
    # x_ref: (tile_m, K) or (Mp, K) if resident     compute dtype (f32 / bf16)
    # w_ref: (K, tile_n)                            compute dtype
    # b_ref: (1, tile_n)                            f32
    # o_ref: (tile_m, tile_n)                       out dtype
    if x_resident:
        row0 = pl.multiple_of(pl.program_id(1) * tile_m, tile_m)
        x = x_ref[pl.ds(row0, tile_m), :]
    else:
        x = x_ref[...]
    logits = jnp.dot(x, w_ref[...], preferred_element_type=jnp.float32)
    logits = logits + b_ref[...]              # (1, tile_n) broadcasts over rows
    relu = jnp.maximum(logits, 0.0)
    # log1p in bf16 only on chips with bf16 EUP and a bf16 output; f32 otherwise.
    o_ref[...] = jnp.log1p(relu.astype(log1p_dtype)).astype(o_ref.dtype)


def mlm_forward(dense_vec, weight, bias, *, tile_m=1024, tile_n=2048,
                compute_dtype=jnp.float32, out_dtype=jnp.float32,
                resident_x=None):
    """log1p(relu(dense_vec @ weight + bias)).

    dense_vec: (..., dense_size)
    weight:    (dense_size, vocab_size)   (transposed vs nn.Linear's (out, in))
    bias:      (vocab_size,)

    Fast path: compute_dtype=out_dtype=jnp.bfloat16 halves both the dominant
    output-writeback HBM stream and the x/W input traffic.  Defaults are f32
    to preserve the PyTorch module's numerics.
    """
    orig_shape = dense_vec.shape
    K = orig_shape[-1]
    V = weight.shape[1]
    x2d = dense_vec.reshape(-1, K)
    M = x2d.shape[0]

    # --- HW-aligned tiles, clamped to the problem size ---
    tile_n, Vp = _pick_tile_n(V, tile_n)
    tile_m = min(_round_up(tile_m, 8), _round_up(M, 8))
    Mp = _round_up(M, tile_m)

    # NOTE: in a real model, pad/cast the weight once at parameter-build time;
    # with a divisor tile_n the weight pad below is skipped entirely.
    if Mp != M:
        x2d = jnp.pad(x2d, ((0, Mp - M), (0, 0)))
    if Vp != V:
        weight = jnp.pad(weight, ((0, 0), (0, Vp - V)))
        bias = jnp.pad(bias, (0, Vp - V))
    if x2d.dtype != compute_dtype:
        x2d = x2d.astype(compute_dtype)
    if weight.dtype != compute_dtype:
        weight = weight.astype(compute_dtype)
    bias2d = bias.reshape(1, Vp).astype(jnp.float32)

    nv = Vp // tile_n     # vocab tiles (outer grid axis, megacore-sharded)
    nm = Mp // tile_m     # row tiles   (inner grid axis)

    in_elt = jnp.dtype(compute_dtype).itemsize
    out_elt = jnp.dtype(out_dtype).itemsize

    # x is tiny on the lane axis (K pads to 128 lanes in VMEM); keep the whole
    # (Mp, K) matrix resident when small so it is DMA'd once, not nv times.
    k_lanes = _round_up(K, 128)
    if resident_x is None:
        resident_x = Mp * k_lanes * in_elt <= (4 << 20)

    # --- VMEM budget (Pallas double-buffers each spec'd array) ---
    x_buf = (Mp if resident_x else tile_m) * k_lanes * in_elt
    w_buf = _round_up(K, 16) * tile_n * in_elt
    b_buf = 8 * tile_n * 4
    o_buf = tile_m * tile_n * out_elt
    need = 2 * (x_buf + w_buf + b_buf + o_buf)
    vmem_limit = min(max(need + (4 << 20), 32 << 20), _vmem_cap_bytes())

    use_bf16_epilogue = (jnp.dtype(out_dtype) == jnp.dtype(jnp.bfloat16)
                         and _bf16_epilogue_supported())
    log1p_dtype = jnp.bfloat16 if use_bf16_epilogue else jnp.float32

    if resident_x:
        x_spec = pl.BlockSpec((Mp, K), lambda j, i: (0, 0))       # fetched once
    else:
        x_spec = pl.BlockSpec((tile_m, K), lambda j, i: (i, 0))

    kernel = functools.partial(mlm_kernel, tile_m=tile_m,
                               x_resident=resident_x, log1p_dtype=log1p_dtype)

    cost = pl.CostEstimate(
        flops=2 * Mp * Vp * K,
        transcendentals=Mp * Vp,
        bytes_accessed=(Mp * Vp * out_elt + K * Vp * in_elt
                        + Mp * K * in_elt + Vp * 4),
    )

    out = pl.pallas_call(
        kernel,
        out_shape=jax.ShapeDtypeStruct((Mp, Vp), out_dtype),
        grid_spec=pltpu.PrefetchScalarGridSpec(
            num_scalar_prefetch=0,
            # vocab OUTER ("parallel": v7x cores get disjoint W tiles, no
            # duplicated W DMA), rows INNER ("arbitrary").  W/bias block index
            # is constant over the inner axis -> each weight tile is fetched
            # from HBM exactly once.
            grid=(nv, nm),
            in_specs=[
                x_spec,                                            # x rows
                pl.BlockSpec((K, tile_n), lambda j, i: (0, j)),    # W vocab tile
                pl.BlockSpec((1, tile_n), lambda j, i: (0, j)),    # bias slice
            ],
            out_specs=pl.BlockSpec((tile_m, tile_n), lambda j, i: (i, j)),
        ),
        compiler_params=pltpu.CompilerParams(
            dimension_semantics=("parallel", "arbitrary"),
            vmem_limit_bytes=vmem_limit,
        ),
        cost_estimate=cost,
    )(x2d, weight, bias2d)

    out = out[:M, :V]
    return out.reshape(*orig_shape[:-1], V)


def mlm_reference(dense_vec, weight, bias):
    return jnp.log1p(jax.nn.relu(dense_vec @ weight + bias))


if __name__ == "__main__":
    # Small deterministic shapes consistent with the module:
    # batch=2, seq=8, dense_size=32, vocab_size=512.
    batch, seq, dense_size, vocab_size = 2, 8, 32, 512

    key = jax.random.PRNGKey(0)
    kx, kw, kb = jax.random.split(key, 3)

    dense_vec = jax.random.normal(kx, (batch, seq, dense_size), dtype=jnp.float32)
    # nn.Linear(dense_size, vocab_size): weight (vocab, dense) — stored transposed.
    weight = jax.random.normal(kw, (dense_size, vocab_size), dtype=jnp.float32) * 0.05
    bias = jax.random.normal(kb, (vocab_size,), dtype=jnp.float32) * 0.05

    ref = mlm_reference(dense_vec, weight, bias)

    # 1) Default f32 path (matches the PyTorch module numerics).
    out = jax.block_until_ready(mlm_forward(dense_vec, weight, bias))
    assert out.shape == (batch, seq, vocab_size)
    assert jnp.allclose(out, ref, atol=1e-5, rtol=1e-5), "f32 mismatch vs reference"

    # 2) Fast path: bf16 compute + bf16 output (+ bf16 epilogue on v6e/v7x).
    out_fast = jax.block_until_ready(
        mlm_forward(dense_vec, weight, bias,
                    compute_dtype=jnp.bfloat16, out_dtype=jnp.bfloat16))
    assert out_fast.shape == (batch, seq, vocab_size)
    assert out_fast.dtype == jnp.bfloat16
    assert jnp.allclose(out_fast.astype(jnp.float32), ref, atol=2e-2, rtol=2e-2), \
        "bf16 fast-path mismatch vs reference"

    # 3) Ragged shapes (exercise the padding path: M=15 rows, V=300 vocab).
    d2 = jax.random.normal(kx, (3, 5, dense_size), dtype=jnp.float32)
    w2 = jax.random.normal(kw, (dense_size, 300), dtype=jnp.float32) * 0.05
    b2 = jax.random.normal(kb, (300,), dtype=jnp.float32) * 0.05
    out2 = jax.block_until_ready(mlm_forward(d2, w2, b2))
    assert out2.shape == (3, 5, 300)
    assert jnp.allclose(out2, mlm_reference(d2, w2, b2), atol=1e-5, rtol=1e-5), \
        "padded-shape mismatch vs reference"

    # 4) Multi-tile grid on both axes: resident-x row slicing and the explicit
    #    non-resident path, at tiny tile sizes.
    d3 = jax.random.normal(kx, (4, 8, dense_size), dtype=jnp.float32)   # M = 32
    ref3 = mlm_reference(d3, weight, bias)
    out3 = jax.block_until_ready(
        mlm_forward(d3, weight, bias, tile_m=8, tile_n=128))
    assert jnp.allclose(out3, ref3, atol=1e-5, rtol=1e-5), "resident-x mismatch"
    out4 = jax.block_until_ready(
        mlm_forward(d3, weight, bias, tile_m=8, tile_n=128, resident_x=False))
    assert jnp.allclose(out4, ref3, atol=1e-5, rtol=1e-5), "tiled-x mismatch"

    print("KERNEL_OK")
</pallas_src>

<mosaic_0001>
module attributes {stable_mosaic.version = 11 : i64} {
  func.func @mlm_kernel(%arg0: i32, %arg1: i32, %arg2: memref<16x32xf32, #tpu.memory_space<vmem>>, %arg3: memref<32x512xf32, #tpu.memory_space<vmem>>, %arg4: memref<1x512xf32, #tpu.memory_space<vmem>>, %arg5: memref<16x512xf32, #tpu.memory_space<vmem>>) attributes {dimension_semantics = [#tpu.dimension_semantics<parallel>, #tpu.dimension_semantics<arbitrary>], iteration_bounds = array<i64: 1, 1>, scalar_prefetch = 0 : i64, scratch_operands = 0 : i64, tpu.core_type = #tpu.core_type<tc>, window_params = [{pipeline_mode = #tpu.pipeline_mode<synchronous>, transform_indices = @transform_0, window_bounds = array<i64: 16, 32>}, {transform_indices = @transform_1, window_bounds = array<i64: 32, 512>}, {transform_indices = @transform_2, window_bounds = array<i64: 1, 512>}, {transform_indices = @transform_3, window_bounds = array<i64: 16, 512>}]} {
    %c16_i32 = arith.constant 16 : i32
    %0 = arith.muli %arg1, %c16_i32 : i32
    %1 = tpu.assume_multiple %0, 16 : i32
    %2 = arith.index_cast %1 : i32 to index
    %c0 = arith.constant 0 : index
    %3 = vector.load %arg2[%2, %c0] : memref<16x32xf32, #tpu.memory_space<vmem>>, vector<16x32xf32>
    %c0_0 = arith.constant 0 : index
    %c0_1 = arith.constant 0 : index
    %4 = vector.load %arg3[%c0_0, %c0_1] : memref<32x512xf32, #tpu.memory_space<vmem>>, vector<32x512xf32>
    %cst = arith.constant dense<0.000000e+00> : vector<16x512xf32>
    %5 = tpu.matmul %3, %4, %cst {dimension_numbers = #tpu.dot_dimension_numbers<[1], [0], [0], [1], [0, 0, 1, 1], [], []>} : vector<16x32xf32>, vector<32x512xf32>, vector<16x512xf32> -> vector<16x512xf32>
    %c0_2 = arith.constant 0 : index
    %c0_3 = arith.constant 0 : index
    %6 = vector.load %arg4[%c0_2, %c0_3] : memref<1x512xf32, #tpu.memory_space<vmem>>, vector<1x512xf32>
    %7 = vector.broadcast %6 : vector<1x512xf32> to vector<16x512xf32>
    %8 = arith.addf %5, %7 : vector<16x512xf32>
    %cst_4 = arith.constant 0.000000e+00 : f32
    %9 = vector.broadcast %cst_4 : f32 to vector<16x512xf32>
    %10 = arith.maximumf %8, %9 : vector<16x512xf32>
    %11 = math.log1p %10 : vector<16x512xf32>
    %c0_5 = arith.constant 0 : index
    %c0_6 = arith.constant 0 : index
    %12 = vector.load %arg5[%c0_5, %c0_6] : memref<16x512xf32, #tpu.memory_space<vmem>>, vector<16x512xf32>
    tpu.vector_store %arg5[%c0_5, %c0_6], %11 {strides = array<i32>} : memref<16x512xf32, #tpu.memory_space<vmem>>, vector<16x512xf32>,
    return
  }
  func.func @transform_0(%arg0: i32, %arg1: i32) -> (i32, i32) {
    %c0_i32 = arith.constant 0 : i32
    %c0_i32_0 = arith.constant 0 : i32
    %c0_i32_1 = arith.constant 0 : i32
    return %c0_i32, %c0_i32_0 : i32, i32
  }
  func.func @transform_1(%arg0: i32, %arg1: i32) -> (i32, i32) {
    %c0_i32 = arith.constant 0 : i32
    %c0_i32_0 = arith.constant 0 : i32
    return %c0_i32, %arg0 : i32, i32
  }
  func.func @transform_2(%arg0: i32, %arg1: i32) -> (i32, i32) {
    %c0_i32 = arith.constant 0 : i32
    %c0_i32_0 = arith.constant 0 : i32
    return %c0_i32, %arg0 : i32, i32
  }
  func.func @transform_3(%arg0: i32, %arg1: i32) -> (i32, i32) {
    %c0_i32 = arith.constant 0 : i32
    return %arg1, %arg0 : i32, i32
  }
}

</mosaic_0001>

<llo_original>
// kernel: tpu_custom_call.1
$region0: #{tpu_custom_call.1}
  #allocation0 [shape = 'u32[]', space=smem, size = 0x4, offset = 0x4, fixed_abs, tag = 'smem constant byte address 0x4 - core index']
  #allocation1 [shape = 'u32[144,128]{1,0:T(1,128)}', space=vmem, size = 0x12000, scoped, tag = 'internal scratch']
  %s0 = inlined_call_operand.hbm [shape: f32[16,32], index: 0, kind: input, shape index: {}]
  %s1 = inlined_call_operand.hbm [shape: f32[32,512], index: 1, kind: input, shape index: {}]
  %s2 = inlined_call_operand.vmem [shape: f32[1,512], index: 2, kind: input, shape index: {}]
  %s3 = inlined_call_operand.hbm [shape: f32[16,512], index: 3, kind: output, shape index: {}]
  %s4 = sld [smem:[#allocation0]]
  $region30: #{tpu_custom_call.1} parent=0
    _
  %s6 = ssub.s32 1, %s4
  %s7 = scalar_select 0, %s6, %s4
  $region1: #{tpu_custom_call.1} parent=0
    #allocation2 [shape = 'u8[8192]{0}', space=vmem, size = 0x2000, scoped, tag = 'input window, operand 0, single buffered']
    #allocation3 [shape = 's32[1]{0}', space=sflag, size = 0x4, scoped, tag = 'scoped memory for tpu_custom_call.1']
    #allocation4 [shape = 's32[1]{0}', space=sflag, size = 0x4, scoped, tag = 'scoped memory for tpu_custom_call.1']
    #allocation5 [shape = 'u8[65536]{0}', space=vmem, size = 0x10000, scoped, tag = 'input window, operand 1, single buffered']
    #allocation6 [shape = 's32[1]{0}', space=sflag, size = 0x4, scoped, tag = 'scoped memory for tpu_custom_call.1']
    #allocation7 [shape = 'u8[32768]{0}', space=vmem, size = 0x8000, scoped, tag = 'output window, operand 0, single buffered']
    %8 = vsyncpa [#allocation3], 0
    %9 = vsyncpa [#allocation6], 0
    %10 = vsyncpa [#allocation4], 0
    // Predicated region
    $region2: #{tpu_custom_call.1} parent=1 // pred_check
      _
    $region3: #{tpu_custom_call.1} parent=1 // pred_check_branch
      %12 = sbr.rel (0) target = $region5
    $region4: #{tpu_custom_call.1} parent=1 // pred_region
      %s14 = ssub.s32 256, 256
      %15 = vsyncadd [#allocation3], %s14
      %s16 = sshll.u32 [#allocation2], 4
      %s17 = int_to_ptr.vmem [resolvable:$true] %s16
      %22 = dma.hbm_to_vmem [thread:$0]  %s0, 256, %s17, [#allocation3], 128, 128, 8
    $region5: #{tpu_custom_call.1} parent=1 // pred_fallthru
      _
    // Predicated region
    $region6: #{tpu_custom_call.1} parent=1 // pred_check
      _
    $region7: #{tpu_custom_call.1} parent=1 // pred_check_branch
      %24 = sbr.rel (0) target = $region9
    $region8: #{tpu_custom_call.1} parent=1 // pred_region
      %s26 = ssub.s32 2048, 2048
      %27 = vsyncadd [#allocation6], %s26
      %s28 = sshll.u32 [#allocation5], 4
      %s29 = int_to_ptr.vmem [resolvable:$true] %s28
      %34 = dma.hbm_to_vmem [thread:$0]  %s1, 2048, %s29, [#allocation6], 512, 512, 32
    $region9: #{tpu_custom_call.1} parent=1 // pred_fallthru
      _
    // Predicated region
    $region10: #{tpu_custom_call.1} parent=1 // pred_check
      _
    $region11: #{tpu_custom_call.1} parent=1 // pred_check_branch
      %36 = sbr.rel (0) target = $region13
    $region12: #{tpu_custom_call.1} parent=1 // pred_region
      _
    $region13: #{tpu_custom_call.1} parent=1 // pred_fallthru
      _
    // Predicated region
    $region14: #{tpu_custom_call.1} parent=1 // pred_check
      _
    $region15: #{tpu_custom_call.1} parent=1 // pred_check_branch
      %38 = sbr.rel (0) target = $region17
    $region16: #{tpu_custom_call.1} parent=1 // pred_region
      %39 = dma.done [#allocation3], 256
    $region17: #{tpu_custom_call.1} parent=1 // pred_fallthru
      _
    // Predicated region
    $region18: #{tpu_custom_call.1} parent=1 // pred_check
      _
    $region19: #{tpu_custom_call.1} parent=1 // pred_check_branch
      %41 = sbr.rel (0) target = $region21
    $region20: #{tpu_custom_call.1} parent=1 // pred_region
      %42 = dma.done [#allocation6], 2048
    $region21: #{tpu_custom_call.1} parent=1 // pred_fallthru
      _
    %s43 = smul.u32 0, 16
    %s44 = scalar_lea.vmem [#allocation2], %s43
    %v45 = vld [vmem:[%s44] sm:$0xff]
    %v46 = vld [vmem:[%s44 + $0x8] sm:$0xff]
    %v47 = vld [vmem:[#allocation5] sm:$0xff]
    %v48 = vld [vmem:[#allocation5 + $0x8] sm:$0xff]
    %v49 = vld [vmem:[#allocation5 + $0x10] sm:$0xff]
    %v50 = vld [vmem:[#allocation5 + $0x18] sm:$0xff]
    %v51 = vld [vmem:[#allocation5 + $0x20] sm:$0xff]
    %v52 = vld [vmem:[#allocation5 + $0x28] sm:$0xff]
    %v53 = vld [vmem:[#allocation5 + $0x30] sm:$0xff]
    %v54 = vld [vmem:[#allocation5 + $0x38] sm:$0xff]
    %v55 = vld [vmem:[#allocation5 + $0x40] sm:$0xff]
    %v56 = vld [vmem:[#allocation5 + $0x48] sm:$0xff]
    %v57 = vld [vmem:[#allocation5 + $0x50] sm:$0xff]
    %v58 = vld [vmem:[#allocation5 + $0x58] sm:$0xff]
    %v59 = vld [vmem:[#allocation5 + $0x60] sm:$0xff]
    %v60 = vld [vmem:[#allocation5 + $0x68] sm:$0xff]
    %v61 = vld [vmem:[#allocation5 + $0x70] sm:$0xff]
    %v62 = vld [vmem:[#allocation5 + $0x78] sm:$0xff]
    %v63 = vld [vmem:[%s2] sm:$0xf]
    %v65 = vlaneseq
    %v66 = vshrl.u32 %v65, 7
    %v67 = vsub.s32 0, %v66
    %v68 = vrot.slane %v63, %v67
    %v69 = vlaneseq
    %v70 = vshrl.u32 %v69, 7
    %v71 = vsub.s32 1, %v70
    %v72 = vrot.slane %v63, %v71
    %v73 = vlaneseq
    %v74 = vshrl.u32 %v73, 7
    %v75 = vsub.s32 2, %v74
    %v76 = vrot.slane %v63, %v75
    %v77 = vlaneseq
    %v78 = vshrl.u32 %v77, 7
    %v79 = vsub.s32 3, %v78
    %v80 = vrot.slane %v63, %v79
    %vm85 = vcmask 261120
    %v87 = vsel %vm85, %v45, 0
    %v90 = vsel %vm85, %v46, 0
    %92 = vmatprep.subr.mxu0 %v48
    %93 = vmatpush1.msra.mxu0 %v47
    %94 = vmatprep.subr.mxu0 %v52
    %95 = vmatpush1.msra.mxu0 %v51
    %96 = vmatprep.subr.mxu0 %v56
    %97 = vmatpush1.msra.mxu0 %v55
    %98 = vmatprep.subr.mxu0 %v60
    %99 = vmatpush1.msra.mxu0 %v59
    %100 = vmatprep.subr.mxu0 0.0
    %101 = vmatpush1.msra.mxu0 0.0
    %102 = vmatprep.subr.mxu0 0.0
    %103 = vmatpush1.msra.mxu0 0.0
    %104 = vmatprep.subr.mxu0 0.0
    %105 = vmatpush1.msra.mxu0 0.0
    %106 = vmatprep.subr.mxu0 0.0
    %107 = vmatpush1.msra.mxu0 0.0
    %108 = vmatprep.subr.mxu0 0.0
    %109 = vmatpush1.msra.mxu0 0.0
    %110 = vmatprep.subr.mxu0 0.0
    %111 = vmatpush1.msra.mxu0 0.0
    %112 = vmatprep.subr.mxu0 0.0
    %113 = vmatpush1.msra.mxu0 0.0
    %114 = vmatprep.subr.mxu0 0.0
    %115 = vmatpush1.msra.mxu0 0.0
    %116 = vmatprep.subr.mxu0 0.0
    %117 = vmatpush1.msra.mxu0 0.0
    %118 = vmatprep.subr.mxu0 0.0
    %119 = vmatpush1.msra.mxu0 0.0
    %120 = vmatprep.subr.mxu0 0.0
    %121 = vmatpush1.msra.mxu0 0.0
    %122 = vmatprep.subr.mxu0 0.0
    %123 = vmatpush1.msra.mxu0 0.0
    %124 = vmatprep.subr.mxu0 0.0
    %125 = vmatpush1.msra.mxu0 0.0
    %126 = vmatprep.subr.mxu0 0.0
    %127 = vmatpush1.msra.mxu0 0.0
    %128 = vmatprep.subr.mxu0 0.0
    %129 = vmatpush1.msra.mxu0 0.0
    %130 = vmatprep.subr.mxu0 0.0
    %131 = vmatpush1.msra.mxu0 0.0
    %132 = vmatprep.subr.mxu0 0.0
    %133 = vmatpush1.msra.mxu0 0.0
    %134 = vmatprep.subr.mxu0 0.0
    %135 = vmatpush1.msra.mxu0 0.0
    %136 = vmatprep.subr.mxu0 0.0
    %137 = vmatpush1.msra.mxu0 0.0
    %138 = vmatprep.subr.mxu0 0.0
    %139 = vmatpush1.msra.mxu0 0.0
    %140 = vmatprep.subr.mxu0 0.0
    %141 = vmatpush1.msra.mxu0 0.0
    %142 = vmatprep.subr.mxu0 0.0
    %143 = vmatpush1.msra.mxu0 0.0
    %144 = vmatprep.subr.mxu0 0.0
    %145 = vmatpush1.msra.mxu0 0.0
    %146 = vmatprep.subr.mxu0 0.0
    %147 = vmatpush1.msra.mxu0 0.0
    %148 = vmatprep.subr.mxu0 0.0
    %149 = vmatpush1.msra.mxu0 0.0
    %150 = vmatprep.subr.mxu0 0.0
    %151 = vmatpush1.msra.mxu0 0.0
    %152 = vmatprep.subr.mxu0 0.0
    %153 = vmatpush1.msra.mxu0 0.0
    %154 = vmatprep.subr.mxu0 0.0
    %155 = vmatpush1.msra.mxu0 0.0
    %156 = vmatprep.mubr.f32.mxu0 0.0
    %157 = vmatmul.mubr.f32.gmra.mrb[0].mxu0 %v87
    %v158 = vpop.f32.mrb[0].mxu0
    %v159 = vadd.f32 %v68, %v158
    %v160 = vpop.f32.mrb[0].mxu0
    %v161 = vadd.f32 %v72, %v160
    %162 = vmatprep.mubr.f32.mxu0 0.0
    %163 = vmatmul.mubr.f32.gmra.mrb[0].mxu0 %v90
    %v164 = vpop.f32.mrb[0].mxu0
    %v165 = vadd.f32 %v68, %v164
    %v166 = vpop.f32.mrb[0].mxu0
    %v167 = vadd.f32 %v72, %v166
    %168 = vdwg.mxu0
    %169 = vmatprep.subr.mxu0 %v50
    %170 = vmatpush1.msra.mxu0 %v49
    %171 = vmatprep.subr.mxu0 %v54
    %172 = vmatpush1.msra.mxu0 %v53
    %173 = vmatprep.subr.mxu0 %v58
    %174 = vmatpush1.msra.mxu0 %v57
    %175 = vmatprep.subr.mxu0 %v62
    %176 = vmatpush1.msra.mxu0 %v61
    %177 = vmatprep.subr.mxu0 0.0
    %178 = vmatpush1.msra.mxu0 0.0
    %179 = vmatprep.subr.mxu0 0.0
    %180 = vmatpush1.msra.mxu0 0.0
    %181 = vmatprep.subr.mxu0 0.0
    %182 = vmatpush1.msra.mxu0 0.0
    %183 = vmatprep.subr.mxu0 0.0
    %184 = vmatpush1.msra.mxu0 0.0
    %185 = vmatprep.subr.mxu0 0.0
    %186 = vmatpush1.msra.mxu0 0.0
    %187 = vmatprep.subr.mxu0 0.0
    %188 = vmatpush1.msra.mxu0 0.0
    %189 = vmatprep.subr.mxu0 0.0
    %190 = vmatpush1.msra.mxu0 0.0
    %191 = vmatprep.subr.mxu0 0.0
    %192 = vmatpush1.msra.mxu0 0.0
    %193 = vmatprep.subr.mxu0 0.0
    %194 = vmatpush1.msra.mxu0 0.0
    %195 = vmatprep.subr.mxu0 0.0
    %196 = vmatpush1.msra.mxu0 0.0
    %197 = vmatprep.subr.mxu0 0.0
    %198 = vmatpush1.msra.mxu0 0.0
    %199 = vmatprep.subr.mxu0 0.0
    %200 = vmatpush1.msra.mxu0 0.0
    %201 = vmatprep.subr.mxu0 0.0
    %202 = vmatpush1.msra.mxu0 0.0
    %203 = vmatprep.subr.mxu0 0.0
    %204 = vmatpush1.msra.mxu0 0.0
    %205 = vmatprep.subr.mxu0 0.0
    %206 = vmatpush1.msra.mxu0 0.0
    %207 = vmatprep.subr.mxu0 0.0
    %208 = vmatpush1.msra.mxu0 0.0
    %209 = vmatprep.subr.mxu0 0.0
    %210 = vmatpush1.msra.mxu0 0.0
    %211 = vmatprep.subr.mxu0 0.0
    %212 = vmatpush1.msra.mxu0 0.0
    %213 = vmatprep.subr.mxu0 0.0
    %214 = vmatpush1.msra.mxu0 0.0
    %215 = vmatprep.subr.mxu0 0.0
    %216 = vmatpush1.msra.mxu0 0.0
    %217 = vmatprep.subr.mxu0 0.0
    %218 = vmatpush1.msra.mxu0 0.0
    %219 = vmatprep.subr.mxu0 0.0
    %220 = vmatpush1.msra.mxu0 0.0
    %221 = vmatprep.subr.mxu0 0.0
    %222 = vmatpush1.msra.mxu0 0.0
    %223 = vmatprep.subr.mxu0 0.0
    %224 = vmatpush1.msra.mxu0 0.0
    %225 = vmatprep.subr.mxu0 0.0
    %226 = vmatpush1.msra.mxu0 0.0
    %227 = vmatprep.subr.mxu0 0.0
    %228 = vmatpush1.msra.mxu0 0.0
    %229 = vmatprep.subr.mxu0 0.0
    %230 = vmatpush1.msra.mxu0 0.0
    %231 = vmatprep.subr.mxu0 0.0
    %232 = vmatpush1.msra.mxu0 0.0
    %233 = vmatprep.mubr.f32.mxu0 0.0
    %234 = vmatmul.mubr.f32.gmra.mrb[0].mxu0 %v87
    %v235 = vpop.f32.mrb[0].mxu0
    %v236 = vadd.f32 %v76, %v235
    %v237 = vpop.f32.mrb[0].mxu0
    %v238 = vadd.f32 %v80, %v237
    %239 = vmatprep.mubr.f32.mxu0 0.0
    %240 = vmatmul.mubr.f32.gmra.mrb[0].mxu0 %v90
    %v241 = vpop.f32.mrb[0].mxu0
    %v242 = vadd.f32 %v76, %v241
    %v243 = vpop.f32.mrb[0].mxu0
    %v244 = vadd.f32 %v80, %v243
    %245 = vdwg.mxu0
    %v246 = vmax.f32 %v159, 0.0
    %v247 = vmax.f32 %v161, 0.0
    %v248 = vmax.f32 %v236, 0.0
    %v249 = vmax.f32 %v238, 0.0
    %v250 = vmax.f32 %v165, 0.0
    %v251 = vmax.f32 %v167, 0.0
    %v252 = vmax.f32 %v242, 0.0
    %v253 = vmax.f32 %v244, 0.0
    %v254 = vadd.f32 %v246, 1.0
    %v255 = vlog2.pop %v254
    %v256 = vmul.f32 %v255, 0.6931472
    %v257 = vmul.f32 -0.5, %v246
    %v258 = vadd.f32 %v257, 1.0
    %v259 = vmul.f32 %v258, %v246
    %v260 = vand.u32 2147483647, %v246
    %vm261 = vcmp.lt.f32.partialorder %v260, 0.0004427343
    %v262 = vsel %vm261, %v259, %v256
    %v263 = vadd.f32 %v247, 1.0
    %v264 = vlog2.pop %v263
    %v265 = vmul.f32 %v264, 0.6931472
    %v266 = vmul.f32 -0.5, %v247
    %v267 = vadd.f32 %v266, 1.0
    %v268 = vmul.f32 %v267, %v247
    %v269 = vand.u32 2147483647, %v247
    %vm270 = vcmp.lt.f32.partialorder %v269, 0.0004427343
    %v271 = vsel %vm270, %v268, %v265
    %v272 = vadd.f32 %v248, 1.0
    %v273 = vlog2.pop %v272
    %v274 = vmul.f32 %v273, 0.6931472
    %v275 = vmul.f32 -0.5, %v248
    %v276 = vadd.f32 %v275, 1.0
    %v277 = vmul.f32 %v276, %v248
    %v278 = vand.u32 2147483647, %v248
    %vm279 = vcmp.lt.f32.partialorder %v278, 0.0004427343
    %v280 = vsel %vm279, %v277, %v274
    %v281 = vadd.f32 %v249, 1.0
    %v282 = vlog2.pop %v281
    %v283 = vmul.f32 %v282, 0.6931472
    %v284 = vmul.f32 -0.5, %v249
    %v285 = vadd.f32 %v284, 1.0
    %v286 = vmul.f32 %v285, %v249
    %v287 = vand.u32 2147483647, %v249
    %vm288 = vcmp.lt.f32.partialorder %v287, 0.0004427343
    %v289 = vsel %vm288, %v286, %v283
    %v290 = vadd.f32 %v250, 1.0
    %v291 = vlog2.pop %v290
    %v292 = vmul.f32 %v291, 0.6931472
    %v293 = vmul.f32 -0.5, %v250
    %v294 = vadd.f32 %v293, 1.0
    %v295 = vmul.f32 %v294, %v250
    %v296 = vand.u32 2147483647, %v250
    %vm297 = vcmp.lt.f32.partialorder %v296, 0.0004427343
    %v298 = vsel %vm297, %v295, %v292
    %v299 = vadd.f32 %v251, 1.0
    %v300 = vlog2.pop %v299
    %v301 = vmul.f32 %v300, 0.6931472
    %v302 = vmul.f32 -0.5, %v251
    %v303 = vadd.f32 %v302, 1.0
    %v304 = vmul.f32 %v303, %v251
    %v305 = vand.u32 2147483647, %v251
    %vm306 = vcmp.lt.f32.partialorder %v305, 0.0004427343
    %v307 = vsel %vm306, %v304, %v301
    %v308 = vadd.f32 %v252, 1.0
    %v309 = vlog2.pop %v308
    %v310 = vmul.f32 %v309, 0.6931472
    %v311 = vmul.f32 -0.5, %v252
    %v312 = vadd.f32 %v311, 1.0
    %v313 = vmul.f32 %v312, %v252
    %v314 = vand.u32 2147483647, %v252
    %vm315 = vcmp.lt.f32.partialorder %v314, 0.0004427343
    %v316 = vsel %vm315, %v313, %v310
    %v317 = vadd.f32 %v253, 1.0
    %v318 = vlog2.pop %v317
    %v319 = vmul.f32 %v318, 0.6931472
    %v320 = vmul.f32 -0.5, %v253
    %v321 = vadd.f32 %v320, 1.0
    %v322 = vmul.f32 %v321, %v253
    %v323 = vand.u32 2147483647, %v253
    %vm324 = vcmp.lt.f32.partialorder %v323, 0.0004427343
    %v325 = vsel %vm324, %v322, %v319
    %326 = vst [vmem:[#allocation7] sm:$0xff] %v262
    %327 = vst [vmem:[#allocation7 + $0x8] sm:$0xff] %v271
    %328 = vst [vmem:[#allocation7 + $0x10] sm:$0xff] %v280
    %329 = vst [vmem:[#allocation7 + $0x18] sm:$0xff] %v289
    %330 = vst [vmem:[#allocation7 + $0x20] sm:$0xff] %v298
    %331 = vst [vmem:[#allocation7 + $0x28] sm:$0xff] %v307
    %332 = vst [vmem:[#allocation7 + $0x30] sm:$0xff] %v316
    %333 = vst [vmem:[#allocation7 + $0x38] sm:$0xff] %v325
    // Predicated region
    $region22: #{tpu_custom_call.1} parent=1 // pred_check
      _
    $region23: #{tpu_custom_call.1} parent=1 // pred_check_branch
      %335 = sbr.rel (0) target = $region25
    $region24: #{tpu_custom_call.1} parent=1 // pred_region
      %s337 = ssub.s32 1024, 1024
      %338 = vsyncadd [#allocation4], %s337
      %s339 = sshll.u32 [#allocation7], 4
      %s340 = int_to_ptr.vmem [resolvable:$true] %s339
      %345 = dma.vmem_to_hbm [thread:$0]  %s340, 1024, %s3, [#allocation4], 512, 512, 32
    $region25: #{tpu_custom_call.1} parent=1 // pred_fallthru
      _
    // Predicated region
    $region26: #{tpu_custom_call.1} parent=1 // pred_check
      _
    $region27: #{tpu_custom_call.1} parent=1 // pred_check_branch
      %347 = sbr.rel (0) target = $region29
    $region28: #{tpu_custom_call.1} parent=1 // pred_region
      %348 = dma.done [#allocation4], 1024
    $region29: #{tpu_custom_call.1} parent=1 // pred_fallthru
      _
    %349 = vsyncpa [#allocation3], 1
    %350 = vsyncpa [#allocation6], 1
    %351 = vsyncpa [#allocation4], 1

</llo_original>
